<compile_context>
chip_gen: v6e
topology: v6e:2x2x1
jax: 0.10.0
libtpu: 0.0.40
codegen_flags: <defaults>
</compile_context>

<pallas_src>
import math

import jax
import jax.numpy as jnp
from jax.experimental import pallas as pl

LANE = 128  # lane-tile width used for slab column alignment


# ----------------------------- Pallas kernel ------------------------------- #
def _make_kernel(B, F, K, E, T_p, N_v):
    f32 = jnp.float32
    BN = B * N_v
    BT = B * T_p

    def kernel(emo_ref, phr_ref, vid_ref, slab_ref, vec_ref, out_ref):
        phr = phr_ref[...]        # (B*T_p, F)   row-stacked phrase features
        vid = vid_ref[...]        # (B*N_v, F)   row-stacked video features
        slab = slab_ref[...]      # (R, 2*128 + ceil(BT/128)*128) weight slab
        vec = vec_ref[...]        # (8, 128)     bias / routing vectors

        # Tile-aligned weight views (lane offsets 0, 128, 256 -> zero-cost).
        wv_w = slab[:F, 0:F]                       # (F, F)
        wac_w = slab[:F, LANE:LANE + K + E]        # (F, K+E)  [agg_w_a | agg_w_c]
        Pblk = slab[:BN, 2 * LANE:2 * LANE + BT]   # (B*N_v, B*T_p) block-diag pool

        # Lane-0-aligned vectors, one per row.
        wv_b = vec[0:1, :F]                        # (1, F)
        wac_b = vec[1:2, :K + E]                   # (1, K+E)
        wr_b = vec[2:3, 0:1]                       # (1, 1)
        wr1 = vec[3:4, :E]                         # (1, E)  ele_route_w[:E]
        wr2 = vec[4:5, :E]                         # (1, E)  ele_route_w[E:]

        # ---- feature_aggregation: all batches row-stacked, weights used once ----
        pooled = jnp.dot(Pblk, phr, preferred_element_type=f32)          # (B*N_v, F)
        c1 = jnp.dot(pooled, wv_w, preferred_element_type=f32) + wv_b    # (B*N_v, F)

        # The two halves of the reference row-concat are processed separately:
        # softmax is per-row and s^T@fa sums over rows, so summing the two
        # contributions below is exact (no materialized concat).
        afa1 = jnp.dot(c1, wac_w, preferred_element_type=f32) + wac_b    # (B*N_v, K+E)
        afa2 = jnp.dot(vid, wac_w, preferred_element_type=f32) + wac_b   # (B*N_v, K+E)

        def row_softmax(a):
            a = a - jnp.max(a, axis=-1, keepdims=True)
            e = jnp.exp(a)
            return e / jnp.sum(e, axis=-1, keepdims=True)                # exact divide

        s1, fa1 = row_softmax(afa1[:, :K]), afa1[:, K:]
        s2, fa2 = row_softmax(afa2[:, :K]), afa2[:, K:]

        # ---- per-batch contraction + element_routing (B static, unrolled) ----
        for b in range(B):
            r0, r1 = b * N_v, (b + 1) * N_v
            # softmax(A)^T @ feat_a over this batch's rows (both concat halves)
            agg = (jax.lax.dot_general(s1[r0:r1], fa1[r0:r1],
                                       (((0,), (0,)), ((), ())),
                                       preferred_element_type=f32)
                   + jax.lax.dot_general(s2[r0:r1], fa2[r0:r1],
                                         (((0,), (0,)), ((), ())),
                                         preferred_element_type=f32))    # (K, E)

            emo_b = emo_ref[b]                                           # (L_t, E)
            # mean_rows(emo @ agg^T) == mean_rows(emo) @ agg^T (linearity, exact)
            emo_mean = jnp.mean(emo_b, axis=0, keepdims=True)            # (1, E)
            # VPU multiply + lane/sublane reductions instead of M=1 MXU matmuls:
            a_pool = jnp.sum(agg * emo_mean, axis=-1, keepdims=True)     # (K, 1)
            route = jnp.sum(a_pool * agg, axis=0, keepdims=True)         # (1, E)

            # ele_route_w(concat([emo, route])) as two lane reductions
            score = (jnp.sum(emo_b * wr1, axis=-1, keepdims=True)
                     + jnp.sum(route * wr2, axis=-1, keepdims=True)
                     + wr_b)                                             # (L_t, 1)
            out_ref[b] = jnp.tanh(score) * emo_b                         # alpha = 1

    return kernel


# ------------------------------ wrapper ------------------------------------ #
def dynamic_emotional_shift(emo, phr, vid, slab, vecs, k):
    B, L_t, E = emo.shape
    _, T_p, F = phr.shape
    _, N_v, _ = vid.shape
    R, W = slab.shape
    VR, VC = vecs.shape

    phr_flat = phr.reshape(B * T_p, F)   # contiguous reshape (free in XLA)
    vid_flat = vid.reshape(B * N_v, F)

    kernel = _make_kernel(B, F, k, E, T_p, N_v)

    in_specs = [
        pl.BlockSpec((B, L_t, E), lambda i: (0, 0, 0)),     # emo (full)
        pl.BlockSpec((B * T_p, F), lambda i: (0, 0)),       # phrase rows (full)
        pl.BlockSpec((B * N_v, F), lambda i: (0, 0)),       # video rows (full)
        pl.BlockSpec((R, W), lambda i: (0, 0)),             # weight slab
        pl.BlockSpec((VR, VC), lambda i: (0, 0)),           # bias/route vectors
    ]
    out_spec = pl.BlockSpec((B, L_t, E), lambda i: (0, 0, 0))

    return pl.pallas_call(
        kernel,
        out_shape=jax.ShapeDtypeStruct((B, L_t, E), jnp.float32),
        grid=(1,),                       # whole batch in one grid step
        in_specs=in_specs,
        out_specs=out_spec,
    )(emo, phr_flat, vid_flat, slab, vecs)


# ------------------------- pure-JAX reference ------------------------------ #
def reference_forward(emo, phr, vid, params):
    P = params["pool_mat"]
    pooled = jnp.einsum("nt,btf->bnf", P, phr)
    c = jnp.concatenate([pooled @ params["wv_w"] + params["wv_b"], vid], axis=1)
    A = c @ params["wa_w"] + params["wa_b"]
    fa = c @ params["wc_w"] + params["wc_b"]
    s = jax.nn.softmax(A, axis=-1)
    agg = jnp.einsum("bnk,bne->bke", s, fa)
    a_cross = jnp.einsum("ble,bke->blk", emo, agg)
    a_pool = jnp.mean(a_cross, axis=1, keepdims=True)
    route = jnp.einsum("bok,bke->boe", a_pool, agg)
    score = emo @ params["wr1"] + route @ params["wr2"] + params["wr_b"]
    return jnp.tanh(score) * emo


# ------------------------------- helpers ------------------------------------ #
def make_adaptive_avgpool_matrix(in_len, out_len):
    """Exact AdaptiveAvgPool1d(out_len) semantics as an (out_len, in_len) matrix."""
    P = jnp.zeros((out_len, in_len), dtype=jnp.float32)
    for i in range(out_len):
        start = math.floor(i * in_len / out_len)
        end = math.ceil((i + 1) * in_len / out_len)
        P = P.at[i, start:end].set(1.0 / (end - start))
    return P


def init_params(key, emo_size, feat_size, k, n_video, phr_len):
    ks = jax.random.split(key, 8)
    scale = 0.1
    p = {
        # nn.Linear stores (out, in); we keep (in, out) so kernel does x @ W.
        "wv_w": scale * jax.random.normal(ks[0], (feat_size, feat_size), jnp.float32),
        "wv_b": scale * jax.random.normal(ks[1], (1, feat_size), jnp.float32),
        "wa_w": scale * jax.random.normal(ks[2], (feat_size, k), jnp.float32),
        "wa_b": scale * jax.random.normal(ks[3], (1, k), jnp.float32),
        "wc_w": scale * jax.random.normal(ks[4], (feat_size, emo_size), jnp.float32),
        "wc_b": scale * jax.random.normal(ks[5], (1, emo_size), jnp.float32),
    }
    wr = scale * jax.random.normal(ks[6], (2 * emo_size, 1), jnp.float32)
    p["wr1"] = wr[:emo_size]
    p["wr2"] = wr[emo_size:]
    p["wr_b"] = scale * jax.random.normal(ks[7], (1, 1), jnp.float32)
    p["pool_mat"] = make_adaptive_avgpool_matrix(phr_len, n_video)
    return p


def pack_params(params, batch, emo_size, feat_size, k, n_video, phr_len):
    """Pack constants: one lane-tile-aligned weight slab + one (8,128) vector slab."""
    F, K, E, N_v, T_p, B = feat_size, k, emo_size, n_video, phr_len, batch
    assert F <= LANE and (K + E) <= LANE, "weight blocks must fit one lane tile"
    BN, BT = B * N_v, B * T_p
    R = ((max(F, BN) + 7) // 8) * 8
    W = 2 * LANE + ((BT + LANE - 1) // LANE) * LANE

    slab = jnp.zeros((R, W), jnp.float32)
    slab = slab.at[:F, :F].set(params["wv_w"])                       # tile 0
    slab = slab.at[:F, LANE:LANE + K + E].set(                       # tile 1
        jnp.concatenate([params["wa_w"], params["wc_w"]], axis=1))
    P = params["pool_mat"]
    for b in range(B):                                               # tiles 2+: block-diag pool
        slab = slab.at[b * N_v:(b + 1) * N_v,
                       2 * LANE + b * T_p:2 * LANE + (b + 1) * T_p].set(P)

    vecs = jnp.zeros((8, LANE), jnp.float32)                         # one vector per row
    vecs = vecs.at[0, :F].set(params["wv_b"][0])
    vecs = vecs.at[1, :K].set(params["wa_b"][0])
    vecs = vecs.at[1, K:K + E].set(params["wc_b"][0])
    vecs = vecs.at[2, 0].set(params["wr_b"][0, 0])
    vecs = vecs.at[3, :E].set(params["wr1"][:, 0])
    vecs = vecs.at[4, :E].set(params["wr2"][:, 0])
    return slab, vecs


# --------------------------------- main ------------------------------------- #
if __name__ == "__main__":
    # Module hyperparameters
    emo_size, feat_size, k, h_list = 32, 32, 8, [2, 4]
    B, L_t, T_p, N_v = 2, 8, 24, 16

    key = jax.random.PRNGKey(0)
    k_emo, k_phr, k_vid, k_par = jax.random.split(key, 4)

    emo_embedding = jax.random.normal(k_emo, (B, L_t, emo_size), jnp.float32)
    phr_feat = jax.random.normal(k_phr, (B, T_p, feat_size), jnp.float32)
    video_feat = jax.random.normal(k_vid, (B, N_v, feat_size), jnp.float32)

    params = init_params(k_par, emo_size, feat_size, k, N_v, T_p)
    slab, vecs = pack_params(params, B, emo_size, feat_size, k, N_v, T_p)

    out = dynamic_emotional_shift(emo_embedding, phr_feat, video_feat,
                                  slab, vecs, k)
    out = jax.block_until_ready(out)

    ref = reference_forward(emo_embedding, phr_feat, video_feat, params)
    if not jnp.allclose(out, ref, rtol=1e-4, atol=1e-4):
        raise AssertionError("Pallas kernel output mismatch vs JAX reference")

    print("KERNEL_OK")
</pallas_src>

<mosaic_0001>
module attributes {stable_mosaic.version = 11 : i64} {
  func.func @kernel(%arg0: i32, %arg1: memref<2x8x32xf32, #tpu.memory_space<vmem>>, %arg2: memref<48x32xf32, #tpu.memory_space<vmem>>, %arg3: memref<32x32xf32, #tpu.memory_space<vmem>>, %arg4: memref<32x384xf32, #tpu.memory_space<vmem>>, %arg5: memref<8x128xf32, #tpu.memory_space<vmem>>, %arg6: memref<2x8x32xf32, #tpu.memory_space<vmem>>) attributes {dimension_semantics = [#tpu.dimension_semantics<arbitrary>], iteration_bounds = array<i64: 1>, scalar_prefetch = 0 : i64, scratch_operands = 0 : i64, tpu.core_type = #tpu.core_type<tc>, window_params = [{pipeline_mode = #tpu.pipeline_mode<synchronous>, transform_indices = @transform_0, window_bounds = array<i64: 2, 8, 32>}, {pipeline_mode = #tpu.pipeline_mode<synchronous>, transform_indices = @transform_1, window_bounds = array<i64: 48, 32>}, {pipeline_mode = #tpu.pipeline_mode<synchronous>, transform_indices = @transform_2, window_bounds = array<i64: 32, 32>}, {pipeline_mode = #tpu.pipeline_mode<synchronous>, transform_indices = @transform_3, window_bounds = array<i64: 32, 384>}, {pipeline_mode = #tpu.pipeline_mode<synchronous>, transform_indices = @transform_4, window_bounds = array<i64: 8, 128>}, {pipeline_mode = #tpu.pipeline_mode<synchronous>, transform_indices = @transform_5, window_bounds = array<i64: 2, 8, 32>}]} {
    %c0 = arith.constant 0 : index
    %c0_0 = arith.constant 0 : index
    %0 = vector.load %arg2[%c0, %c0_0] : memref<48x32xf32, #tpu.memory_space<vmem>>, vector<48x32xf32>
    %c0_1 = arith.constant 0 : index
    %c0_2 = arith.constant 0 : index
    %1 = vector.load %arg3[%c0_1, %c0_2] : memref<32x32xf32, #tpu.memory_space<vmem>>, vector<32x32xf32>
    %c0_3 = arith.constant 0 : index
    %c0_4 = arith.constant 0 : index
    %2 = vector.load %arg4[%c0_3, %c0_4] : memref<32x384xf32, #tpu.memory_space<vmem>>, vector<32x384xf32>
    %c0_5 = arith.constant 0 : index
    %c0_6 = arith.constant 0 : index
    %3 = vector.load %arg5[%c0_5, %c0_6] : memref<8x128xf32, #tpu.memory_space<vmem>>, vector<8x128xf32>
    %4 = vector.extract_strided_slice %2 {offsets = [0, 0], sizes = [32, 32], strides = [1, 1]} : vector<32x384xf32> to vector<32x32xf32>
    %5 = vector.extract_strided_slice %2 {offsets = [0, 128], sizes = [32, 40], strides = [1, 1]} : vector<32x384xf32> to vector<32x40xf32>
    %6 = vector.extract_strided_slice %2 {offsets = [0, 256], sizes = [32, 48], strides = [1, 1]} : vector<32x384xf32> to vector<32x48xf32>
    %7 = vector.extract_strided_slice %3 {offsets = [0, 0], sizes = [1, 32], strides = [1, 1]} : vector<8x128xf32> to vector<1x32xf32>
    %8 = vector.extract_strided_slice %3 {offsets = [1, 0], sizes = [1, 40], strides = [1, 1]} : vector<8x128xf32> to vector<1x40xf32>
    %9 = vector.extract_strided_slice %3 {offsets = [2, 0], sizes = [1, 1], strides = [1, 1]} : vector<8x128xf32> to vector<1x1xf32>
    %10 = vector.extract_strided_slice %3 {offsets = [3, 0], sizes = [1, 32], strides = [1, 1]} : vector<8x128xf32> to vector<1x32xf32>
    %11 = vector.extract_strided_slice %3 {offsets = [4, 0], sizes = [1, 32], strides = [1, 1]} : vector<8x128xf32> to vector<1x32xf32>
    %cst = arith.constant dense<0.000000e+00> : vector<32x32xf32>
    %12 = tpu.matmul %6, %0, %cst {dimension_numbers = #tpu.dot_dimension_numbers<[1], [0], [0], [1], [0, 0, 1, 1], [], []>} : vector<32x48xf32>, vector<48x32xf32>, vector<32x32xf32> -> vector<32x32xf32>
    %cst_7 = arith.constant dense<0.000000e+00> : vector<32x32xf32>
    %13 = tpu.matmul %12, %4, %cst_7 {dimension_numbers = #tpu.dot_dimension_numbers<[1], [0], [0], [1], [0, 0, 1, 1], [], []>} : vector<32x32xf32>, vector<32x32xf32>, vector<32x32xf32> -> vector<32x32xf32>
    %14 = vector.broadcast %7 : vector<1x32xf32> to vector<32x32xf32>
    %15 = arith.addf %13, %14 : vector<32x32xf32>
    %cst_8 = arith.constant dense<0.000000e+00> : vector<32x40xf32>
    %16 = tpu.matmul %15, %5, %cst_8 {dimension_numbers = #tpu.dot_dimension_numbers<[1], [0], [0], [1], [0, 0, 1, 1], [], []>} : vector<32x32xf32>, vector<32x40xf32>, vector<32x40xf32> -> vector<32x40xf32>
    %17 = vector.broadcast %8 : vector<1x40xf32> to vector<32x40xf32>
    %18 = arith.addf %16, %17 : vector<32x40xf32>
    %cst_9 = arith.constant dense<0.000000e+00> : vector<32x40xf32>
    %19 = tpu.matmul %1, %5, %cst_9 {dimension_numbers = #tpu.dot_dimension_numbers<[1], [0], [0], [1], [0, 0, 1, 1], [], []>} : vector<32x32xf32>, vector<32x40xf32>, vector<32x40xf32> -> vector<32x40xf32>
    %20 = vector.broadcast %8 : vector<1x40xf32> to vector<32x40xf32>
    %21 = arith.addf %19, %20 : vector<32x40xf32>
    %22 = vector.extract_strided_slice %18 {offsets = [0, 0], sizes = [32, 8], strides = [1, 1]} : vector<32x40xf32> to vector<32x8xf32>
    %cst_10 = arith.constant dense<0xFF800000> : vector<32xf32>
    %23 = vector.multi_reduction <maximumf>, %22, %cst_10 [1] : vector<32x8xf32> to vector<32xf32>
    %24 = vector.shape_cast %23 : vector<32xf32> to vector<32x1xf32>
    %25 = vector.broadcast %24 : vector<32x1xf32> to vector<32x8xf32>
    %26 = arith.subf %22, %25 : vector<32x8xf32>
    %27 = math.exp %26 : vector<32x8xf32>
    %cst_11 = arith.constant dense<0.000000e+00> : vector<32xf32>
    %28 = vector.multi_reduction <add>, %27, %cst_11 [1] : vector<32x8xf32> to vector<32xf32>
    %29 = vector.shape_cast %28 : vector<32xf32> to vector<32x1xf32>
    %30 = vector.broadcast %29 : vector<32x1xf32> to vector<32x8xf32>
    %31 = arith.divf %27, %30 : vector<32x8xf32>
    %32 = vector.extract_strided_slice %18 {offsets = [0, 8], sizes = [32, 32], strides = [1, 1]} : vector<32x40xf32> to vector<32x32xf32>
    %33 = vector.extract_strided_slice %21 {offsets = [0, 0], sizes = [32, 8], strides = [1, 1]} : vector<32x40xf32> to vector<32x8xf32>
    %cst_12 = arith.constant dense<0xFF800000> : vector<32xf32>
    %34 = vector.multi_reduction <maximumf>, %33, %cst_12 [1] : vector<32x8xf32> to vector<32xf32>
    %35 = vector.shape_cast %34 : vector<32xf32> to vector<32x1xf32>
    %36 = vector.broadcast %35 : vector<32x1xf32> to vector<32x8xf32>
    %37 = arith.subf %33, %36 : vector<32x8xf32>
    %38 = math.exp %37 : vector<32x8xf32>
    %cst_13 = arith.constant dense<0.000000e+00> : vector<32xf32>
    %39 = vector.multi_reduction <add>, %38, %cst_13 [1] : vector<32x8xf32> to vector<32xf32>
    %40 = vector.shape_cast %39 : vector<32xf32> to vector<32x1xf32>
    %41 = vector.broadcast %40 : vector<32x1xf32> to vector<32x8xf32>
    %42 = arith.divf %38, %41 : vector<32x8xf32>
    %43 = vector.extract_strided_slice %21 {offsets = [0, 8], sizes = [32, 32], strides = [1, 1]} : vector<32x40xf32> to vector<32x32xf32>
    %44 = vector.extract_strided_slice %31 {offsets = [0, 0], sizes = [16, 8], strides = [1, 1]} : vector<32x8xf32> to vector<16x8xf32>
    %45 = vector.extract_strided_slice %32 {offsets = [0, 0], sizes = [16, 32], strides = [1, 1]} : vector<32x32xf32> to vector<16x32xf32>
    %cst_14 = arith.constant dense<0.000000e+00> : vector<8x32xf32>
    %46 = tpu.matmul %44, %45, %cst_14 {dimension_numbers = #tpu.dot_dimension_numbers<[0], [0], [1], [1], [0, 1, 1, 1], [], []>} : vector<16x8xf32>, vector<16x32xf32>, vector<8x32xf32> -> vector<8x32xf32>
    %47 = vector.extract_strided_slice %42 {offsets = [0, 0], sizes = [16, 8], strides = [1, 1]} : vector<32x8xf32> to vector<16x8xf32>
    %48 = vector.extract_strided_slice %43 {offsets = [0, 0], sizes = [16, 32], strides = [1, 1]} : vector<32x32xf32> to vector<16x32xf32>
    %cst_15 = arith.constant dense<0.000000e+00> : vector<8x32xf32>
    %49 = tpu.matmul %47, %48, %cst_15 {dimension_numbers = #tpu.dot_dimension_numbers<[0], [0], [1], [1], [0, 1, 1, 1], [], []>} : vector<16x8xf32>, vector<16x32xf32>, vector<8x32xf32> -> vector<8x32xf32>
    %50 = arith.addf %46, %49 : vector<8x32xf32>
    %c0_16 = arith.constant 0 : index
    %c0_17 = arith.constant 0 : index
    %c0_18 = arith.constant 0 : index
    %51 = vector.load %arg1[%c0_16, %c0_17, %c0_18] : memref<2x8x32xf32, #tpu.memory_space<vmem>>, vector<1x8x32xf32>
    %52 = vector.shape_cast %51 : vector<1x8x32xf32> to vector<8x32xf32>
    %cst_19 = arith.constant dense<0.000000e+00> : vector<32xf32>
    %53 = vector.multi_reduction <add>, %52, %cst_19 [0] : vector<8x32xf32> to vector<32xf32>
    %54 = vector.shape_cast %53 : vector<32xf32> to vector<1x32xf32>
    %cst_20 = arith.constant 8.000000e+00 : f32
    %55 = vector.broadcast %cst_20 : f32 to vector<1x32xf32>
    %56 = arith.divf %54, %55 : vector<1x32xf32>
    %57 = vector.broadcast %56 : vector<1x32xf32> to vector<8x32xf32>
    %58 = arith.mulf %50, %57 : vector<8x32xf32>
    %cst_21 = arith.constant dense<0.000000e+00> : vector<8xf32>
    %59 = vector.multi_reduction <add>, %58, %cst_21 [1] : vector<8x32xf32> to vector<8xf32>
    %60 = vector.shape_cast %59 : vector<8xf32> to vector<8x1xf32>
    %61 = vector.broadcast %60 : vector<8x1xf32> to vector<8x32xf32>
    %62 = arith.mulf %61, %50 : vector<8x32xf32>
    %cst_22 = arith.constant dense<0.000000e+00> : vector<32xf32>
    %63 = vector.multi_reduction <add>, %62, %cst_22 [0] : vector<8x32xf32> to vector<32xf32>
    %64 = vector.shape_cast %63 : vector<32xf32> to vector<1x32xf32>
    %65 = vector.broadcast %10 : vector<1x32xf32> to vector<8x32xf32>
    %66 = arith.mulf %52, %65 : vector<8x32xf32>
    %cst_23 = arith.constant dense<0.000000e+00> : vector<8xf32>
    %67 = vector.multi_reduction <add>, %66, %cst_23 [1] : vector<8x32xf32> to vector<8xf32>
    %68 = vector.shape_cast %67 : vector<8xf32> to vector<8x1xf32>
    %69 = arith.mulf %64, %11 : vector<1x32xf32>
    %cst_24 = arith.constant dense<0.000000e+00> : vector<1xf32>
    %70 = vector.multi_reduction <add>, %69, %cst_24 [1] : vector<1x32xf32> to vector<1xf32>
    %71 = vector.shape_cast %70 : vector<1xf32> to vector<1x1xf32>
    %72 = vector.broadcast %71 : vector<1x1xf32> to vector<8x1xf32>
    %73 = arith.addf %68, %72 : vector<8x1xf32>
    %74 = vector.broadcast %9 : vector<1x1xf32> to vector<8x1xf32>
    %75 = arith.addf %73, %74 : vector<8x1xf32>
    %76 = math.tanh %75 : vector<8x1xf32>
    %77 = vector.broadcast %76 : vector<8x1xf32> to vector<8x32xf32>
    %78 = arith.mulf %77, %52 : vector<8x32xf32>
    %c0_25 = arith.constant 0 : index
    %c0_26 = arith.constant 0 : index
    %c0_27 = arith.constant 0 : index
    %79 = vector.load %arg6[%c0_25, %c0_26, %c0_27] : memref<2x8x32xf32, #tpu.memory_space<vmem>>, vector<1x8x32xf32>
    %80 = vector.shape_cast %79 : vector<1x8x32xf32> to vector<8x32xf32>
    %81 = vector.shape_cast %78 : vector<8x32xf32> to vector<1x8x32xf32>
    tpu.vector_store %arg6[%c0_25, %c0_26, %c0_27], %81 {strides = array<i32>} : memref<2x8x32xf32, #tpu.memory_space<vmem>>, vector<1x8x32xf32>,
    %82 = vector.extract_strided_slice %31 {offsets = [16, 0], sizes = [16, 8], strides = [1, 1]} : vector<32x8xf32> to vector<16x8xf32>
    %83 = vector.extract_strided_slice %32 {offsets = [16, 0], sizes = [16, 32], strides = [1, 1]} : vector<32x32xf32> to vector<16x32xf32>
    %cst_28 = arith.constant dense<0.000000e+00> : vector<8x32xf32>
    %84 = tpu.matmul %82, %83, %cst_28 {dimension_numbers = #tpu.dot_dimension_numbers<[0], [0], [1], [1], [0, 1, 1, 1], [], []>} : vector<16x8xf32>, vector<16x32xf32>, vector<8x32xf32> -> vector<8x32xf32>
    %85 = vector.extract_strided_slice %42 {offsets = [16, 0], sizes = [16, 8], strides = [1, 1]} : vector<32x8xf32> to vector<16x8xf32>
    %86 = vector.extract_strided_slice %43 {offsets = [16, 0], sizes = [16, 32], strides = [1, 1]} : vector<32x32xf32> to vector<16x32xf32>
    %cst_29 = arith.constant dense<0.000000e+00> : vector<8x32xf32>
    %87 = tpu.matmul %85, %86, %cst_29 {dimension_numbers = #tpu.dot_dimension_numbers<[0], [0], [1], [1], [0, 1, 1, 1], [], []>} : vector<16x8xf32>, vector<16x32xf32>, vector<8x32xf32> -> vector<8x32xf32>
    %88 = arith.addf %84, %87 : vector<8x32xf32>
    %c1 = arith.constant 1 : index
    %c0_30 = arith.constant 0 : index
    %c0_31 = arith.constant 0 : index
    %89 = vector.load %arg1[%c1, %c0_30, %c0_31] : memref<2x8x32xf32, #tpu.memory_space<vmem>>, vector<1x8x32xf32>
    %90 = vector.shape_cast %89 : vector<1x8x32xf32> to vector<8x32xf32>
    %cst_32 = arith.constant dense<0.000000e+00> : vector<32xf32>
    %91 = vector.multi_reduction <add>, %90, %cst_32 [0] : vector<8x32xf32> to vector<32xf32>
    %92 = vector.shape_cast %91 : vector<32xf32> to vector<1x32xf32>
    %cst_33 = arith.constant 8.000000e+00 : f32
    %93 = vector.broadcast %cst_33 : f32 to vector<1x32xf32>
    %94 = arith.divf %92, %93 : vector<1x32xf32>
    %95 = vector.broadcast %94 : vector<1x32xf32> to vector<8x32xf32>
    %96 = arith.mulf %88, %95 : vector<8x32xf32>
    %cst_34 = arith.constant dense<0.000000e+00> : vector<8xf32>
    %97 = vector.multi_reduction <add>, %96, %cst_34 [1] : vector<8x32xf32> to vector<8xf32>
    %98 = vector.shape_cast %97 : vector<8xf32> to vector<8x1xf32>
    %99 = vector.broadcast %98 : vector<8x1xf32> to vector<8x32xf32>
    %100 = arith.mulf %99, %88 : vector<8x32xf32>
    %cst_35 = arith.constant dense<0.000000e+00> : vector<32xf32>
    %101 = vector.multi_reduction <add>, %100, %cst_35 [0] : vector<8x32xf32> to vector<32xf32>
    %102 = vector.shape_cast %101 : vector<32xf32> to vector<1x32xf32>
    %103 = vector.broadcast %10 : vector<1x32xf32> to vector<8x32xf32>
    %104 = arith.mulf %90, %103 : vector<8x32xf32>
    %cst_36 = arith.constant dense<0.000000e+00> : vector<8xf32>
    %105 = vector.multi_reduction <add>, %104, %cst_36 [1] : vector<8x32xf32> to vector<8xf32>
    %106 = vector.shape_cast %105 : vector<8xf32> to vector<8x1xf32>
    %107 = arith.mulf %102, %11 : vector<1x32xf32>
    %cst_37 = arith.constant dense<0.000000e+00> : vector<1xf32>
    %108 = vector.multi_reduction <add>, %107, %cst_37 [1] : vector<1x32xf32> to vector<1xf32>
    %109 = vector.shape_cast %108 : vector<1xf32> to vector<1x1xf32>
    %110 = vector.broadcast %109 : vector<1x1xf32> to vector<8x1xf32>
    %111 = arith.addf %106, %110 : vector<8x1xf32>
    %112 = vector.broadcast %9 : vector<1x1xf32> to vector<8x1xf32>
    %113 = arith.addf %111, %112 : vector<8x1xf32>
    %114 = math.tanh %113 : vector<8x1xf32>
    %115 = vector.broadcast %114 : vector<8x1xf32> to vector<8x32xf32>
    %116 = arith.mulf %115, %90 : vector<8x32xf32>
    %c1_38 = arith.constant 1 : index
    %c0_39 = arith.constant 0 : index
    %c0_40 = arith.constant 0 : index
    %117 = vector.load %arg6[%c1_38, %c0_39, %c0_40] : memref<2x8x32xf32, #tpu.memory_space<vmem>>, vector<1x8x32xf32>
    %118 = vector.shape_cast %117 : vector<1x8x32xf32> to vector<8x32xf32>
    %119 = vector.shape_cast %116 : vector<8x32xf32> to vector<1x8x32xf32>
    tpu.vector_store %arg6[%c1_38, %c0_39, %c0_40], %119 {strides = array<i32>} : memref<2x8x32xf32, #tpu.memory_space<vmem>>, vector<1x8x32xf32>,
    return
  }
  func.func @transform_0(%arg0: i32) -> (i32, i32, i32) {
    %c0_i32 = arith.constant 0 : i32
    %c0_i32_0 = arith.constant 0 : i32
    %c0_i32_1 = arith.constant 0 : i32
    %c0_i32_2 = arith.constant 0 : i32
    return %c0_i32, %c0_i32_0, %c0_i32_1 : i32, i32, i32
  }
  func.func @transform_1(%arg0: i32) -> (i32, i32) {
    %c0_i32 = arith.constant 0 : i32
    %c0_i32_0 = arith.constant 0 : i32
    %c0_i32_1 = arith.constant 0 : i32
    return %c0_i32, %c0_i32_0 : i32, i32
  }
  func.func @transform_2(%arg0: i32) -> (i32, i32) {
    %c0_i32 = arith.constant 0 : i32
    %c0_i32_0 = arith.constant 0 : i32
    %c0_i32_1 = arith.constant 0 : i32
    return %c0_i32, %c0_i32_0 : i32, i32
  }
  func.func @transform_3(%arg0: i32) -> (i32, i32) {
    %c0_i32 = arith.constant 0 : i32
    %c0_i32_0 = arith.constant 0 : i32
    %c0_i32_1 = arith.constant 0 : i32
    return %c0_i32, %c0_i32_0 : i32, i32
  }
  func.func @transform_4(%arg0: i32) -> (i32, i32) {
    %c0_i32 = arith.constant 0 : i32
    %c0_i32_0 = arith.constant 0 : i32
    %c0_i32_1 = arith.constant 0 : i32
    return %c0_i32, %c0_i32_0 : i32, i32
  }
  func.func @transform_5(%arg0: i32) -> (i32, i32, i32) {
    %c0_i32 = arith.constant 0 : i32
    %c0_i32_0 = arith.constant 0 : i32
    %c0_i32_1 = arith.constant 0 : i32
    %c0_i32_2 = arith.constant 0 : i32
    return %c0_i32, %c0_i32_0, %c0_i32_1 : i32, i32, i32
  }
}

</mosaic_0001>

<llo_original>
// kernel: tpu_custom_call.1
$region0: #{tpu_custom_call.1}
  #allocation0 [shape = 'u32[]', space=smem, size = 0x4, offset = 0x4, fixed_abs, tag = 'smem constant byte address 0x4 - core index']
  #allocation1 [shape = 'u32[144,128]{1,0:T(1,128)}', space=vmem, size = 0x12000, scoped, tag = 'internal scratch']
  %s0 = inlined_call_operand.vmem [shape: f32[2,8,32], index: 0, kind: input, shape index: {}]
  %s1 = inlined_call_operand.vmem [shape: f32[48,32], index: 1, kind: input, shape index: {}]
  %s2 = inlined_call_operand.vmem [shape: f32[32,32], index: 2, kind: input, shape index: {}]
  %s3 = inlined_call_operand.hbm [shape: f32[32,384], index: 3, kind: input, shape index: {}]
  %s4 = inlined_call_operand.vmem [shape: f32[8,128], index: 4, kind: input, shape index: {}]
  %s5 = inlined_call_operand.hbm [shape: f32[2,8,32], index: 5, kind: output, shape index: {}]
  %s6 = sld [smem:[#allocation0]]
  $region34: #{tpu_custom_call.1} parent=0
    _
  %s8 = ssub.s32 1, %s6
  %s9 = scalar_select 0, %s8, %s6
  $region1: #{tpu_custom_call.1} parent=0
    #allocation2 [shape = 'u8[49152]{0}', space=vmem, size = 0xc000, scoped, tag = 'input window, operand 3, single buffered']
    #allocation3 [shape = 's32[1]{0}', space=sflag, size = 0x4, scoped, tag = 'scoped memory for tpu_custom_call.1']
    #allocation4 [shape = 's32[1]{0}', space=sflag, size = 0x4, scoped, tag = 'scoped memory for tpu_custom_call.1']
    #allocation5 [shape = 'u8[8192]{0}', space=vmem, size = 0x2000, scoped, tag = 'output window, operand 0, single buffered']
    %10 = vsyncpa [#allocation3], 0
    %11 = vsyncpa [#allocation4], 0
    // Predicated region
    $region2: #{tpu_custom_call.1} parent=1 // pred_check
      _
    $region3: #{tpu_custom_call.1} parent=1 // pred_check_branch
      %13 = sbr.rel (0) target = $region5
    $region4: #{tpu_custom_call.1} parent=1 // pred_region
      _
    $region5: #{tpu_custom_call.1} parent=1 // pred_fallthru
      _
    // Predicated region
    $region6: #{tpu_custom_call.1} parent=1 // pred_check
      _
    $region7: #{tpu_custom_call.1} parent=1 // pred_check_branch
      %15 = sbr.rel (0) target = $region9
    $region8: #{tpu_custom_call.1} parent=1 // pred_region
      _
    $region9: #{tpu_custom_call.1} parent=1 // pred_fallthru
      _
    // Predicated region
    $region10: #{tpu_custom_call.1} parent=1 // pred_check
      _
    $region11: #{tpu_custom_call.1} parent=1 // pred_check_branch
      %17 = sbr.rel (0) target = $region13
    $region12: #{tpu_custom_call.1} parent=1 // pred_region
      _
    $region13: #{tpu_custom_call.1} parent=1 // pred_fallthru
      _
    // Predicated region
    $region14: #{tpu_custom_call.1} parent=1 // pred_check
      _
    $region15: #{tpu_custom_call.1} parent=1 // pred_check_branch
      %19 = sbr.rel (0) target = $region17
    $region16: #{tpu_custom_call.1} parent=1 // pred_region
      %s21 = ssub.s32 1536, 1536
      %22 = vsyncadd [#allocation3], %s21
      %s23 = sshll.u32 [#allocation2], 4
      %s24 = int_to_ptr.vmem [resolvable:$true] %s23
      %29 = dma.hbm_to_vmem [thread:$0]  %s3, 1536, %s24, [#allocation3], 384, 384, 24
    $region17: #{tpu_custom_call.1} parent=1 // pred_fallthru
      _
    // Predicated region
    $region18: #{tpu_custom_call.1} parent=1 // pred_check
      _
    $region19: #{tpu_custom_call.1} parent=1 // pred_check_branch
      %31 = sbr.rel (0) target = $region21
    $region20: #{tpu_custom_call.1} parent=1 // pred_region
      _
    $region21: #{tpu_custom_call.1} parent=1 // pred_fallthru
      _
    // Predicated region
    $region22: #{tpu_custom_call.1} parent=1 // pred_check
      _
    $region23: #{tpu_custom_call.1} parent=1 // pred_check_branch
      %33 = sbr.rel (0) target = $region25
    $region24: #{tpu_custom_call.1} parent=1 // pred_region
      %34 = dma.done [#allocation3], 1536
    $region25: #{tpu_custom_call.1} parent=1 // pred_fallthru
      _
    %v35 = vld [vmem:[%s1] sm:$0xff]
    %v36 = vld [vmem:[%s1 + $0x8] sm:$0xff]
    %v37 = vld [vmem:[%s1 + $0x10] sm:$0xff]
    %v38 = vld [vmem:[%s1 + $0x18] sm:$0xff]
    %v39 = vld [vmem:[%s1 + $0x20] sm:$0xff]
    %v40 = vld [vmem:[%s1 + $0x28] sm:$0xff]
    %v41 = vld [vmem:[%s2] sm:$0xff]
    %v42 = vld [vmem:[%s2 + $0x8] sm:$0xff]
    %v43 = vld [vmem:[%s2 + $0x10] sm:$0xff]
    %v44 = vld [vmem:[%s2 + $0x18] sm:$0xff]
    %v45 = vld [vmem:[#allocation2] sm:$0xff]
    %v46 = vld [vmem:[#allocation2 + $0x8] sm:$0xff]
    %v47 = vld [vmem:[#allocation2 + $0x10] sm:$0xff]
    %v48 = vld [vmem:[#allocation2 + $0x18] sm:$0xff]
    %v49 = vld [vmem:[#allocation2 + $0x20] sm:$0xff]
    %v50 = vld [vmem:[#allocation2 + $0x28] sm:$0xff]
    %v51 = vld [vmem:[#allocation2 + $0x30] sm:$0xff]
    %v52 = vld [vmem:[#allocation2 + $0x38] sm:$0xff]
    %v53 = vld [vmem:[#allocation2 + $0x40] sm:$0xff]
    %v54 = vld [vmem:[#allocation2 + $0x48] sm:$0xff]
    %v55 = vld [vmem:[#allocation2 + $0x50] sm:$0xff]
    %v56 = vld [vmem:[#allocation2 + $0x58] sm:$0xff]
    %v57 = vld [vmem:[%s4] sm:$0xff]
    %vm58 = vcmask 392192
    %v60 = vsel %vm58, %v47, 0
    %v63 = vsel %vm58, %v50, 0
    %v66 = vsel %vm58, %v53, 0
    %v69 = vsel %vm58, %v56, 0
    %71 = vmatprep.subr.mxu0 0.0
    %72 = vmatpush1.msra.mxu0 0.0
    %73 = vmatprep.subr.mxu0 0.0
    %74 = vmatpush1.msra.mxu0 0.0
    %75 = vmatprep.subr.mxu0 0.0
    %76 = vmatpush1.msra.mxu0 0.0
    %77 = vmatprep.subr.mxu0 0.0
    %78 = vmatpush1.msra.mxu0 0.0
    %79 = vmatprep.subr.mxu0 0.0
    %80 = vmatpush1.msra.mxu0 0.0
    %81 = vmatprep.subr.mxu0 0.0
    %82 = vmatpush1.msra.mxu0 0.0
    %83 = vmatprep.subr.mxu0 0.0
    %84 = vmatpush1.msra.mxu0 0.0
    %85 = vmatprep.subr.mxu0 0.0
    %86 = vmatpush1.msra.mxu0 0.0
    %87 = vmatprep.subr.mxu0 0.0
    %88 = vmatpush1.msra.mxu0 0.0
    %89 = vmatprep.subr.mxu0 0.0
    %90 = vmatpush1.msra.mxu0 0.0
    %91 = vmatprep.subr.mxu0 0.0
    %92 = vmatpush1.msra.mxu0 %v40
    %93 = vmatprep.subr.mxu0 0.0
    %94 = vmatpush1.msra.mxu0 %v39
    %95 = vmatprep.subr.mxu0 0.0
    %96 = vmatpush1.msra.mxu0 %v38
    %97 = vmatprep.subr.mxu0 0.0
    %98 = vmatpush1.msra.mxu0 %v37
    %99 = vmatprep.subr.mxu0 0.0
    %100 = vmatpush1.msra.mxu0 %v36
    %101 = vmatprep.subr.mxu0 0.0
    %102 = vmatpush1.msra.mxu0 %v35
    %103 = vmatprep.subr.mxu0 0.0
    %104 = vmatpush2.msra.mxu0 0.0
    %105 = vmatprep.subr.mxu0 0.0
    %106 = vmatpush2.msra.mxu0 0.0
    %107 = vmatprep.subr.mxu0 0.0
    %108 = vmatpush2.msra.mxu0 0.0
    %109 = vmatprep.subr.mxu0 0.0
    %110 = vmatpush2.msra.mxu0 0.0
    %111 = vmatprep.subr.mxu0 0.0
    %112 = vmatpush2.msra.mxu0 0.0
    %113 = vmatprep.subr.mxu0 0.0
    %114 = vmatpush2.msra.mxu0 0.0
    %115 = vmatprep.subr.mxu0 0.0
    %116 = vmatpush2.msra.mxu0 0.0
    %117 = vmatprep.subr.mxu0 0.0
    %118 = vmatpush2.msra.mxu0 0.0
    %119 = vmatprep.subr.mxu0 0.0
    %120 = vmatpush2.msra.mxu0 0.0
    %121 = vmatprep.subr.mxu0 0.0
    %122 = vmatpush2.msra.mxu0 0.0
    %123 = vmatprep.subr.mxu0 0.0
    %124 = vmatpush2.msra.mxu0 0.0
    %125 = vmatprep.subr.mxu0 0.0
    %126 = vmatpush2.msra.mxu0 0.0
    %127 = vmatprep.subr.mxu0 0.0
    %128 = vmatpush2.msra.mxu0 0.0
    %129 = vmatprep.subr.mxu0 0.0
    %130 = vmatpush2.msra.mxu0 0.0
    %131 = vmatprep.subr.mxu0 0.0
    %132 = vmatpush2.msra.mxu0 0.0
    %133 = vmatprep.subr.mxu0 0.0
    %134 = vmatpush2.msra.mxu0 0.0
    %135 = vmatprep.mubr.f32.mxu0 0.0
    %136 = vmatmul.mubr.f32.gmra.mxu0 %v60
    %v137 = vpop.f32.mrf.mxu0
    %v138 = vadd.f32 0.0, %v137
    %v139 = vpop.f32.mrf.mxu0
    %140 = vmatprep.mubr.f32.mxu0 0.0
    %141 = vmatmul.mubr.f32.gmra.mxu0 %v63
    %v142 = vpop.f32.mrf.mxu0
    %v143 = vadd.f32 0.0, %v142
    %v144 = vpop.f32.mrf.mxu0
    %145 = vmatprep.mubr.f32.mxu0 0.0
    %146 = vmatmul.mubr.f32.gmra.mxu0 %v66
    %v147 = vpop.f32.mrf.mxu0
    %v148 = vadd.f32 0.0, %v147
    %v149 = vpop.f32.mrf.mxu0
    %150 = vmatprep.mubr.f32.mxu0 0.0
    %151 = vmatmul.mubr.f32.gmra.mxu0 %v69
    %v152 = vpop.f32.mrf.mxu0
    %v153 = vadd.f32 0.0, %v152
    %v154 = vpop.f32.mrf.mxu0
    %155 = vdwg.mxu0
    %v156 = vlaneseq
    %v157 = vshrl.u32 %v156, 7
    %v158 = vsub.s32 0, %v157
    %v159 = vrot.slane %v57, %v158
    %vm160 = vcmask 261120
    %v162 = vsel %vm160, %v138, 0
    %v165 = vsel %vm160, %v143, 0
    %v168 = vsel %vm160, %v148, 0
    %v171 = vsel %vm160, %v153, 0
    %173 = vmatprep.subr.mxu0 0.0
    %174 = vmatpush1.msra.mxu0 0.0
    %175 = vmatprep.subr.mxu0 0.0
    %176 = vmatpush1.msra.mxu0 0.0
    %177 = vmatprep.subr.mxu0 0.0
    %178 = vmatpush1.msra.mxu0 0.0
    %179 = vmatprep.subr.mxu0 0.0
    %180 = vmatpush1.msra.mxu0 0.0
    %181 = vmatprep.subr.mxu0 0.0
    %182 = vmatpush1.msra.mxu0 0.0
    %183 = vmatprep.subr.mxu0 0.0
    %184 = vmatpush1.msra.mxu0 0.0
    %185 = vmatprep.subr.mxu0 0.0
    %186 = vmatpush1.msra.mxu0 0.0
    %187 = vmatprep.subr.mxu0 0.0
    %188 = vmatpush1.msra.mxu0 0.0
    %189 = vmatprep.subr.mxu0 0.0
    %190 = vmatpush1.msra.mxu0 0.0
    %191 = vmatprep.subr.mxu0 0.0
    %192 = vmatpush1.msra.mxu0 0.0
    %193 = vmatprep.subr.mxu0 0.0
    %194 = vmatpush1.msra.mxu0 0.0
    %195 = vmatprep.subr.mxu0 0.0
    %196 = vmatpush1.msra.mxu0 0.0
    %197 = vmatprep.subr.mxu0 0.0
    %198 = vmatpush1.msra.mxu0 %v54
    %199 = vmatprep.subr.mxu0 0.0
    %200 = vmatpush1.msra.mxu0 %v51
    %201 = vmatprep.subr.mxu0 0.0
    %202 = vmatpush1.msra.mxu0 %v48
    %203 = vmatprep.subr.mxu0 0.0
    %204 = vmatpush1.msra.mxu0 %v45
    %205 = vmatprep.subr.mxu0 0.0
    %206 = vmatpush2.msra.mxu0 0.0
    %207 = vmatprep.subr.mxu0 0.0
    %208 = vmatpush2.msra.mxu0 0.0
    %209 = vmatprep.subr.mxu0 0.0
    %210 = vmatpush2.msra.mxu0 0.0
    %211 = vmatprep.subr.mxu0 0.0
    %212 = vmatpush2.msra.mxu0 0.0
    %213 = vmatprep.subr.mxu0 0.0
    %214 = vmatpush2.msra.mxu0 0.0
    %215 = vmatprep.subr.mxu0 0.0
    %216 = vmatpush2.msra.mxu0 0.0
    %217 = vmatprep.subr.mxu0 0.0
    %218 = vmatpush2.msra.mxu0 0.0
    %219 = vmatprep.subr.mxu0 0.0
    %220 = vmatpush2.msra.mxu0 0.0
    %221 = vmatprep.subr.mxu0 0.0
    %222 = vmatpush2.msra.mxu0 0.0
    %223 = vmatprep.subr.mxu0 0.0
    %224 = vmatpush2.msra.mxu0 0.0
    %225 = vmatprep.subr.mxu0 0.0
    %226 = vmatpush2.msra.mxu0 0.0
    %227 = vmatprep.subr.mxu0 0.0
    %228 = vmatpush2.msra.mxu0 0.0
    %229 = vmatprep.subr.mxu0 0.0
    %230 = vmatpush2.msra.mxu0 0.0
    %231 = vmatprep.subr.mxu0 0.0
    %232 = vmatpush2.msra.mxu0 0.0
    %233 = vmatprep.subr.mxu0 0.0
    %234 = vmatpush2.msra.mxu0 0.0
    %235 = vmatprep.subr.mxu0 0.0
    %236 = vmatpush2.msra.mxu0 0.0
    %237 = vmatprep.mubr.f32.mxu0 0.0
    %238 = vmatmul.mubr.f32.gmra.mxu0 %v162
    %v239 = vpop.f32.mrf.mxu0
    %v240 = vadd.f32 %v159, %v239
    %v241 = vpop.f32.mrf.mxu0
    %242 = vmatprep.mubr.f32.mxu0 0.0
    %243 = vmatmul.mubr.f32.gmra.mxu0 %v165
    %v244 = vpop.f32.mrf.mxu0
    %v245 = vadd.f32 %v159, %v244
    %v246 = vpop.f32.mrf.mxu0
    %247 = vmatprep.mubr.f32.mxu0 0.0
    %248 = vmatmul.mubr.f32.gmra.mxu0 %v168
    %v249 = vpop.f32.mrf.mxu0
    %v250 = vadd.f32 %v159, %v249
    %v251 = vpop.f32.mrf.mxu0
    %252 = vmatprep.mubr.f32.mxu0 0.0
    %253 = vmatmul.mubr.f32.gmra.mxu0 %v171
    %v254 = vpop.f32.mrf.mxu0
    %v255 = vadd.f32 %v159, %v254
    %v256 = vpop.f32.mrf.mxu0
    %257 = vdwg.mxu0
    %v258 = vlaneseq
    %v259 = vshrl.u32 %v258, 7
    %v260 = vsub.s32 1, %v259
    %v261 = vrot.slane %v57, %v260
    %v263 = vsel %vm160, %v240, 0
    %v266 = vsel %vm160, %v245, 0
    %v269 = vsel %vm160, %v250, 0
    %v272 = vsel %vm160, %v255, 0
    %274 = vmatprep.subr.mxu0 0.0
    %275 = vmatpush1.msra.mxu0 0.0
    %276 = vmatprep.subr.mxu0 0.0
    %277 = vmatpush1.msra.mxu0 0.0
    %278 = vmatprep.subr.mxu0 0.0
    %279 = vmatpush1.msra.mxu0 0.0
    %280 = vmatprep.subr.mxu0 0.0
    %281 = vmatpush1.msra.mxu0 0.0
    %282 = vmatprep.subr.mxu0 0.0
    %283 = vmatpush1.msra.mxu0 0.0
    %284 = vmatprep.subr.mxu0 0.0
    %285 = vmatpush1.msra.mxu0 0.0
    %286 = vmatprep.subr.mxu0 0.0
    %287 = vmatpush1.msra.mxu0 0.0
    %288 = vmatprep.subr.mxu0 0.0
    %289 = vmatpush1.msra.mxu0 0.0
    %290 = vmatprep.subr.mxu0 0.0
    %291 = vmatpush1.msra.mxu0 0.0
    %292 = vmatprep.subr.mxu0 0.0
    %293 = vmatpush1.msra.mxu0 0.0
    %294 = vmatprep.subr.mxu0 0.0
    %295 = vmatpush1.msra.mxu0 0.0
    %296 = vmatprep.subr.mxu0 0.0
    %297 = vmatpush1.msra.mxu0 0.0
    %298 = vmatprep.subr.mxu0 0.0
    %299 = vmatpush1.msra.mxu0 %v55
    %300 = vmatprep.subr.mxu0 0.0
    %301 = vmatpush1.msra.mxu0 %v52
    %302 = vmatprep.subr.mxu0 0.0
    %303 = vmatpush1.msra.mxu0 %v49
    %304 = vmatprep.subr.mxu0 0.0
    %305 = vmatpush1.msra.mxu0 %v46
    %306 = vmatprep.subr.mxu0 0.0
    %307 = vmatpush2.msra.mxu0 0.0
    %308 = vmatprep.subr.mxu0 0.0
    %309 = vmatpush2.msra.mxu0 0.0
    %310 = vmatprep.subr.mxu0 0.0
    %311 = vmatpush2.msra.mxu0 0.0
    %312 = vmatprep.subr.mxu0 0.0
    %313 = vmatpush2.msra.mxu0 0.0
    %314 = vmatprep.subr.mxu0 0.0
    %315 = vmatpush2.msra.mxu0 0.0
    %316 = vmatprep.subr.mxu0 0.0
    %317 = vmatpush2.msra.mxu0 0.0
    %318 = vmatprep.subr.mxu0 0.0
    %319 = vmatpush2.msra.mxu0 0.0
    %320 = vmatprep.subr.mxu0 0.0
    %321 = vmatpush2.msra.mxu0 0.0
    %322 = vmatprep.subr.mxu0 0.0
    %323 = vmatpush2.msra.mxu0 0.0
    %324 = vmatprep.subr.mxu0 0.0
    %325 = vmatpush2.msra.mxu0 0.0
    %326 = vmatprep.subr.mxu0 0.0
    %327 = vmatpush2.msra.mxu0 0.0
    %328 = vmatprep.subr.mxu0 0.0
    %329 = vmatpush2.msra.mxu0 0.0
    %330 = vmatprep.subr.mxu0 0.0
    %331 = vmatpush2.msra.mxu0 0.0
    %332 = vmatprep.subr.mxu0 0.0
    %333 = vmatpush2.msra.mxu0 0.0
    %334 = vmatprep.subr.mxu0 0.0
    %335 = vmatpush2.msra.mxu0 0.0
    %336 = vmatprep.subr.mxu0 0.0
    %337 = vmatpush2.msra.mxu0 0.0
    %338 = vmatprep.mubr.f32.mxu0 0.0
    %339 = vmatmul.mubr.f32.gmra.mxu0 %v263
    %v340 = vpop.f32.mrf.mxu0
    %v341 = vadd.f32 %v261, %v340
    %v342 = vpop.f32.mrf.mxu0
    %343 = vmatprep.mubr.f32.mxu0 0.0
    %344 = vmatmul.mubr.f32.gmra.mxu0 %v266
    %v345 = vpop.f32.mrf.mxu0
    %v346 = vadd.f32 %v261, %v345
    %v347 = vpop.f32.mrf.mxu0
    %348 = vmatprep.mubr.f32.mxu0 0.0
    %349 = vmatmul.mubr.f32.gmra.mxu0 %v269
    %v350 = vpop.f32.mrf.mxu0
    %v351 = vadd.f32 %v261, %v350
    %v352 = vpop.f32.mrf.mxu0
    %353 = vmatprep.mubr.f32.mxu0 0.0
    %354 = vmatmul.mubr.f32.gmra.mxu0 %v272
    %v355 = vpop.f32.mrf.mxu0
    %v356 = vadd.f32 %v261, %v355
    %v357 = vpop.f32.mrf.mxu0
    %358 = vdwg.mxu0
    %v360 = vsel %vm160, %v41, 0
    %v363 = vsel %vm160, %v42, 0
    %v366 = vsel %vm160, %v43, 0
    %v369 = vsel %vm160, %v44, 0
    %371 = vmatprep.subr.mxu0 0.0
    %372 = vmatpush1.msra.mxu0 0.0
    %373 = vmatprep.subr.mxu0 0.0
    %374 = vmatpush1.msra.mxu0 0.0
    %375 = vmatprep.subr.mxu0 0.0
    %376 = vmatpush1.msra.mxu0 0.0
    %377 = vmatprep.subr.mxu0 0.0
    %378 = vmatpush1.msra.mxu0 0.0
    %379 = vmatprep.subr.mxu0 0.0
    %380 = vmatpush1.msra.mxu0 0.0
    %381 = vmatprep.subr.mxu0 0.0
    %382 = vmatpush1.msra.mxu0 0.0
    %383 = vmatprep.subr.mxu0 0.0
    %384 = vmatpush1.msra.mxu0 0.0
    %385 = vmatprep.subr.mxu0 0.0
    %386 = vmatpush1.msra.mxu0 0.0
    %387 = vmatprep.subr.mxu0 0.0
    %388 = vmatpush1.msra.mxu0 0.0
    %389 = vmatprep.subr.mxu0 0.0
    %390 = vmatpush1.msra.mxu0 0.0
    %391 = vmatprep.subr.mxu0 0.0
    %392 = vmatpush1.msra.mxu0 0.0
    %393 = vmatprep.subr.mxu0 0.0
    %394 = vmatpush1.msra.mxu0 0.0
    %395 = vmatprep.subr.mxu0 0.0
    %396 = vmatpush1.msra.mxu0 %v55
    %397 = vmatprep.subr.mxu0 0.0
    %398 = vmatpush1.msra.mxu0 %v52
    %399 = vmatprep.subr.mxu0 0.0
    %400 = vmatpush1.msra.mxu0 %v49
    %401 = vmatprep.subr.mxu0 0.0
    %402 = vmatpush1.msra.mxu0 %v46
    %403 = vmatprep.subr.mxu0 0.0
    %404 = vmatpush2.msra.mxu0 0.0
    %405 = vmatprep.subr.mxu0 0.0
    %406 = vmatpush2.msra.mxu0 0.0
    %407 = vmatprep.subr.mxu0 0.0
    %408 = vmatpush2.msra.mxu0 0.0
    %409 = vmatprep.subr.mxu0 0.0
    %410 = vmatpush2.msra.mxu0 0.0
    %411 = vmatprep.subr.mxu0 0.0
    %412 = vmatpush2.msra.mxu0 0.0
    %413 = vmatprep.subr.mxu0 0.0
    %414 = vmatpush2.msra.mxu0 0.0
    %415 = vmatprep.subr.mxu0 0.0
    %416 = vmatpush2.msra.mxu0 0.0
    %417 = vmatprep.subr.mxu0 0.0
    %418 = vmatpush2.msra.mxu0 0.0
    %419 = vmatprep.subr.mxu0 0.0
    %420 = vmatpush2.msra.mxu0 0.0
    %421 = vmatprep.subr.mxu0 0.0
    %422 = vmatpush2.msra.mxu0 0.0
    %423 = vmatprep.subr.mxu0 0.0
    %424 = vmatpush2.msra.mxu0 0.0
    %425 = vmatprep.subr.mxu0 0.0
    %426 = vmatpush2.msra.mxu0 0.0
    %427 = vmatprep.subr.mxu0 0.0
    %428 = vmatpush2.msra.mxu0 0.0
    %429 = vmatprep.subr.mxu0 0.0
    %430 = vmatpush2.msra.mxu0 0.0
    %431 = vmatprep.subr.mxu0 0.0
    %432 = vmatpush2.msra.mxu0 0.0
    %433 = vmatprep.subr.mxu0 0.0
    %434 = vmatpush2.msra.mxu0 0.0
    %435 = vmatprep.mubr.f32.mxu0 0.0
    %436 = vmatmul.mubr.f32.gmra.mxu0 %v360
    %v437 = vpop.f32.mrf.mxu0
    %v438 = vadd.f32 %v261, %v437
    %v439 = vpop.f32.mrf.mxu0
    %440 = vmatprep.mubr.f32.mxu0 0.0
    %441 = vmatmul.mubr.f32.gmra.mxu0 %v363
    %v442 = vpop.f32.mrf.mxu0
    %v443 = vadd.f32 %v261, %v442
    %v444 = vpop.f32.mrf.mxu0
    %445 = vmatprep.mubr.f32.mxu0 0.0
    %446 = vmatmul.mubr.f32.gmra.mxu0 %v366
    %v447 = vpop.f32.mrf.mxu0
    %v448 = vadd.f32 %v261, %v447
    %v449 = vpop.f32.mrf.mxu0
    %450 = vmatprep.mubr.f32.mxu0 0.0
    %451 = vmatmul.mubr.f32.gmra.mxu0 %v369
    %v452 = vpop.f32.mrf.mxu0
    %v453 = vadd.f32 %v261, %v452
    %v454 = vpop.f32.mrf.mxu0
    %455 = vdwg.mxu0
    %vm456 = vcmask 64512
    %v457 = vsel %vm456, %v341, -inf
    %458 = vmax.xlane.f32.xlu0 %v457
    %v459 = vpop.xlane.xlu0 %458
    %v460 = vsel %vm456, %v346, -inf
    %461 = vmax.xlane.f32.xlu0 %v460
    %v462 = vpop.xlane.xlu0 %461
    %v463 = vsel %vm456, %v351, -inf
    %464 = vmax.xlane.f32.xlu0 %v463
    %v465 = vpop.xlane.xlu0 %464
    %v466 = vsel %vm456, %v356, -inf
    %467 = vmax.xlane.f32.xlu0 %v466
    %v468 = vpop.xlane.xlu0 %467
    %v469 = vsub.f32 %v341, %v459
    %v470 = vsub.f32 %v346, %v462
    %v471 = vsub.f32 %v351, %v465
    %v472 = vsub.f32 %v356, %v468
    %v473 = vmul.f32 %v469, 1.442695
    %v474 = vpow.pop %v473
    %v475 = vmul.f32 %v470, 1.442695
    %v476 = vpow.pop %v475
    %v477 = vmul.f32 %v471, 1.442695
    %v478 = vpow.pop %v477
    %v479 = vmul.f32 %v472, 1.442695
    %v480 = vpow.pop %v479
    %v481 = vsel %vm456, %v474, 0.0
    %482 = vadd.xlane.f32.xlu0 %v481
    %v483 = vpop.xlane.xlu0 %482
    %v484 = vsel %vm456, %v476, 0.0
    %485 = vadd.xlane.f32.xlu0 %v484
    %v486 = vpop.xlane.xlu0 %485
    %v487 = vsel %vm456, %v478, 0.0
    %488 = vadd.xlane.f32.xlu0 %v487
    %v489 = vpop.xlane.xlu0 %488
    %v490 = vsel %vm456, %v480, 0.0
    %491 = vadd.xlane.f32.xlu0 %v490
    %v492 = vpop.xlane.xlu0 %491
    %v493 = vrcp.pop %v483
    %v494 = vmul.f32 %v474, %v493
    %v495 = vrcp.pop %v486
    %v496 = vmul.f32 %v476, %v495
    %v497 = vrcp.pop %v489
    %v498 = vmul.f32 %v478, %v497
    %v499 = vrcp.pop %v492
    %v500 = vmul.f32 %v480, %v499
    %v501 = vsel %vm456, %v438, -inf
    %502 = vmax.xlane.f32.xlu0 %v501
    %v503 = vpop.xlane.xlu0 %502
    %v504 = vsel %vm456, %v443, -inf
    %505 = vmax.xlane.f32.xlu0 %v504
    %v506 = vpop.xlane.xlu0 %505
    %v507 = vsel %vm456, %v448, -inf
    %508 = vmax.xlane.f32.xlu0 %v507
    %v509 = vpop.xlane.xlu0 %508
    %v510 = vsel %vm456, %v453, -inf
    %511 = vmax.xlane.f32.xlu0 %v510
    %v512 = vpop.xlane.xlu0 %511
    %v513 = vsub.f32 %v438, %v503
    %v514 = vsub.f32 %v443, %v506
    %v515 = vsub.f32 %v448, %v509
    %v516 = vsub.f32 %v453, %v512
    %v517 = vmul.f32 %v513, 1.442695
    %v518 = vpow.pop %v517
    %v519 = vmul.f32 %v514, 1.442695
    %v520 = vpow.pop %v519
    %v521 = vmul.f32 %v515, 1.442695
    %v522 = vpow.pop %v521
    %v523 = vmul.f32 %v516, 1.442695
    %v524 = vpow.pop %v523
    %v525 = vsel %vm456, %v518, 0.0
    %526 = vadd.xlane.f32.xlu0 %v525
    %v527 = vpop.xlane.xlu0 %526
    %v528 = vsel %vm456, %v520, 0.0
    %529 = vadd.xlane.f32.xlu0 %v528
    %v530 = vpop.xlane.xlu0 %529
    %v531 = vsel %vm456, %v522, 0.0
    %532 = vadd.xlane.f32.xlu0 %v531
    %v533 = vpop.xlane.xlu0 %532
    %v534 = vsel %vm456, %v524, 0.0
    %535 = vadd.xlane.f32.xlu0 %v534
    %v536 = vpop.xlane.xlu0 %535
    %v537 = vrcp.pop %v527
    %v538 = vmul.f32 %v518, %v537
    %v539 = vrcp.pop %v530
    %v540 = vmul.f32 %v520, %v539
    %v541 = vrcp.pop %v533
    %v542 = vmul.f32 %v522, %v541
    %v543 = vrcp.pop %v536
    %v544 = vmul.f32 %v524, %v543
    %545 = vxpose.xlu0.b32.start [1/16] %v538, 128
    %546 = vxpose.xlu0.b32.cont [2/16] %v540, 128
    %547 = vxpose.xlu0.b32.cont [3/16] 0.0, 128
    %548 = vxpose.xlu0.b32.cont [4/16] 0.0, 128
    %549 = vxpose.xlu0.b32.cont [5/16] 0.0, 128
    %550 = vxpose.xlu0.b32.cont [6/16] 0.0, 128
    %551 = vxpose.xlu0.b32.cont [7/16] 0.0, 128
    %552 = vxpose.xlu0.b32.cont [8/16] 0.0, 128
    %553 = vxpose.xlu0.b32.cont [9/16] 0.0, 128
    %554 = vxpose.xlu0.b32.cont [10/16] 0.0, 128
    %555 = vxpose.xlu0.b32.cont [11/16] 0.0, 128
    %556 = vxpose.xlu0.b32.cont [12/16] 0.0, 128
    %557 = vxpose.xlu0.b32.cont [13/16] 0.0, 128
    %558 = vxpose.xlu0.b32.cont [14/16] 0.0, 128
    %559 = vxpose.xlu0.b32.cont [15/16] 0.0, 128
    %560 = vxpose.xlu0.b32.end [16/16] 0.0, 128
    %v561 = vpop.trf.xlu0
    %v562 = vpop.trf.xlu0
    %v563 = vpop.trf.xlu0
    %v564 = vpop.trf.xlu0
    %v565 = vpop.trf.xlu0
    %v566 = vpop.trf.xlu0
    %v567 = vpop.trf.xlu0
    %v568 = vpop.trf.xlu0
    %v569 = vpop.trf.xlu0
    %v570 = vpop.trf.xlu0
    %v571 = vpop.trf.xlu0
    %v572 = vpop.trf.xlu0
    %v573 = vpop.trf.xlu0
    %v574 = vpop.trf.xlu0
    %v575 = vpop.trf.xlu0
    %v576 = vpop.trf.xlu0
    %579 = vrot.lane.b32.xlu0 %v438, 120
    %v580 = vpop.permute.xlu0 %579
    %581 = vrot.lane.b32.xlu0 %v443, 120
    %v582 = vpop.permute.xlu0 %581
    %vm585 = vcmask 130048
    %v587 = vsel %vm585, %v561, 0
    %589 = vmatprep.subr.mxu0 0.0
    %590 = vmatpush1.msra.mxu0 0.0
    %591 = vmatprep.subr.mxu0 0.0
    %592 = vmatpush1.msra.mxu0 0.0
    %593 = vmatprep.subr.mxu0 0.0
    %594 = vmatpush1.msra.mxu0 0.0
    %595 = vmatprep.subr.mxu0 0.0
    %596 = vmatpush1.msra.mxu0 0.0
    %597 = vmatprep.subr.mxu0 0.0
    %598 = vmatpush1.msra.mxu0 0.0
    %599 = vmatprep.subr.mxu0 0.0
    %600 = vmatpush1.msra.mxu0 0.0
    %601 = vmatprep.subr.mxu0 0.0
    %602 = vmatpush1.msra.mxu0 0.0
    %603 = vmatprep.subr.mxu0 0.0
    %604 = vmatpush1.msra.mxu0 0.0
    %605 = vmatprep.subr.mxu0 0.0
    %606 = vmatpush1.msra.mxu0 0.0
    %607 = vmatprep.subr.mxu0 0.0
    %608 = vmatpush1.msra.mxu0 0.0
    %609 = vmatprep.subr.mxu0 0.0
    %610 = vmatpush1.msra.mxu0 0.0
    %611 = vmatprep.subr.mxu0 0.0
    %612 = vmatpush1.msra.mxu0 0.0
    %613 = vmatprep.subr.mxu0 0.0
    %614 = vmatpush1.msra.mxu0 0.0
    %615 = vmatprep.subr.mxu0 0.0
    %616 = vmatpush1.msra.mxu0 0.0
    %617 = vmatprep.subr.mxu0 0.0
    %618 = vmatpush1.msra.mxu0 %v582
    %619 = vmatprep.subr.mxu0 0.0
    %620 = vmatpush1.msra.mxu0 %v580
    %621 = vmatprep.subr.mxu0 0.0
    %622 = vmatpush2.msra.mxu0 0.0
    %623 = vmatprep.subr.mxu0 0.0
    %624 = vmatpush2.msra.mxu0 0.0
    %625 = vmatprep.subr.mxu0 0.0
    %626 = vmatpush2.msra.mxu0 0.0
    %627 = vmatprep.subr.mxu0 0.0
    %628 = vmatpush2.msra.mxu0 0.0
    %629 = vmatprep.subr.mxu0 0.0
    %630 = vmatpush2.msra.mxu0 0.0
    %631 = vmatprep.subr.mxu0 0.0
    %632 = vmatpush2.msra.mxu0 0.0
    %633 = vmatprep.subr.mxu0 0.0
    %634 = vmatpush2.msra.mxu0 0.0
    %635 = vmatprep.subr.mxu0 0.0
    %636 = vmatpush2.msra.mxu0 0.0
    %637 = vmatprep.subr.mxu0 0.0
    %638 = vmatpush2.msra.mxu0 0.0
    %639 = vmatprep.subr.mxu0 0.0
    %640 = vmatpush2.msra.mxu0 0.0
    %641 = vmatprep.subr.mxu0 0.0
    %642 = vmatpush2.msra.mxu0 0.0
    %643 = vmatprep.subr.mxu0 0.0
    %644 = vmatpush2.msra.mxu0 0.0
    %645 = vmatprep.subr.mxu0 0.0
    %646 = vmatpush2.msra.mxu0 0.0
    %647 = vmatprep.subr.mxu0 0.0
    %648 = vmatpush2.msra.mxu0 0.0
    %649 = vmatprep.subr.mxu0 0.0
    %650 = vmatpush2.msra.mxu0 0.0
    %651 = vmatprep.subr.mxu0 0.0
    %652 = vmatpush2.msra.mxu0 0.0
    %653 = vmatprep.mubr.f32.mxu0 0.0
    %654 = vmatmul.mubr.f32.gmra.mxu0 %v587
    %v655 = vpop.f32.mrf.mxu0
    %v656 = vadd.f32 0.0, %v655
    %v657 = vpop.f32.mrf.mxu0
    %658 = vdwg.mxu0
    %659 = vxpose.xlu0.b32.start [1/16] %v494, 128
    %660 = vxpose.xlu0.b32.cont [2/16] %v496, 128
    %661 = vxpose.xlu0.b32.cont [3/16] 0.0, 128
    %662 = vxpose.xlu0.b32.cont [4/16] 0.0, 128
    %663 = vxpose.xlu0.b32.cont [5/16] 0.0, 128
    %664 = vxpose.xlu0.b32.cont [6/16] 0.0, 128
    %665 = vxpose.xlu0.b32.cont [7/16] 0.0, 128
    %666 = vxpose.xlu0.b32.cont [8/16] 0.0, 128
    %667 = vxpose.xlu0.b32.cont [9/16] 0.0, 128
    %668 = vxpose.xlu0.b32.cont [10/16] 0.0, 128
    %669 = vxpose.xlu0.b32.cont [11/16] 0.0, 128
    %670 = vxpose.xlu0.b32.cont [12/16] 0.0, 128
    %671 = vxpose.xlu0.b32.cont [13/16] 0.0, 128
    %672 = vxpose.xlu0.b32.cont [14/16] 0.0, 128
    %673 = vxpose.xlu0.b32.cont [15/16] 0.0, 128
    %674 = vxpose.xlu0.b32.end [16/16] 0.0, 128
    %v675 = vpop.trf.xlu0
    %v676 = vpop.trf.xlu0
    %v677 = vpop.trf.xlu0
    %v678 = vpop.trf.xlu0
    %v679 = vpop.trf.xlu0
    %v680 = vpop.trf.xlu0
    %v681 = vpop.trf.xlu0
    %v682 = vpop.trf.xlu0
    %v683 = vpop.trf.xlu0
    %v684 = vpop.trf.xlu0
    %v685 = vpop.trf.xlu0
    %v686 = vpop.trf.xlu0
    %v687 = vpop.trf.xlu0
    %v688 = vpop.trf.xlu0
    %v689 = vpop.trf.xlu0
    %v690 = vpop.trf.xlu0
    %693 = vrot.lane.b32.xlu0 %v341, 120
    %v694 = vpop.permute.xlu0 %693
    %695 = vrot.lane.b32.xlu0 %v346, 120
    %v696 = vpop.permute.xlu0 %695
    %v700 = vsel %vm585, %v675, 0
    %702 = vmatprep.subr.mxu0 0.0
    %703 = vmatpush1.msra.mxu0 0.0
    %704 = vmatprep.subr.mxu0 0.0
    %705 = vmatpush1.msra.mxu0 0.0
    %706 = vmatprep.subr.mxu0 0.0
    %707 = vmatpush1.msra.mxu0 0.0
    %708 = vmatprep.subr.mxu0 0.0
    %709 = vmatpush1.msra.mxu0 0.0
    %710 = vmatprep.subr.mxu0 0.0
    %711 = vmatpush1.msra.mxu0 0.0
    %712 = vmatprep.subr.mxu0 0.0
    %713 = vmatpush1.msra.mxu0 0.0
    %714 = vmatprep.subr.mxu0 0.0
    %715 = vmatpush1.msra.mxu0 0.0
    %716 = vmatprep.subr.mxu0 0.0
    %717 = vmatpush1.msra.mxu0 0.0
    %718 = vmatprep.subr.mxu0 0.0
    %719 = vmatpush1.msra.mxu0 0.0
    %720 = vmatprep.subr.mxu0 0.0
    %721 = vmatpush1.msra.mxu0 0.0
    %722 = vmatprep.subr.mxu0 0.0
    %723 = vmatpush1.msra.mxu0 0.0
    %724 = vmatprep.subr.mxu0 0.0
    %725 = vmatpush1.msra.mxu0 0.0
    %726 = vmatprep.subr.mxu0 0.0
    %727 = vmatpush1.msra.mxu0 0.0
    %728 = vmatprep.subr.mxu0 0.0
    %729 = vmatpush1.msra.mxu0 0.0
    %730 = vmatprep.subr.mxu0 0.0
    %731 = vmatpush1.msra.mxu0 %v696
    %732 = vmatprep.subr.mxu0 0.0
    %733 = vmatpush1.msra.mxu0 %v694
    %734 = vmatprep.subr.mxu0 0.0
    %735 = vmatpush2.msra.mxu0 0.0
    %736 = vmatprep.subr.mxu0 0.0
    %737 = vmatpush2.msra.mxu0 0.0
    %738 = vmatprep.subr.mxu0 0.0
    %739 = vmatpush2.msra.mxu0 0.0
    %740 = vmatprep.subr.mxu0 0.0
    %741 = vmatpush2.msra.mxu0 0.0
    %742 = vmatprep.subr.mxu0 0.0
    %743 = vmatpush2.msra.mxu0 0.0
    %744 = vmatprep.subr.mxu0 0.0
    %745 = vmatpush2.msra.mxu0 0.0
    %746 = vmatprep.subr.mxu0 0.0
    %747 = vmatpush2.msra.mxu0 0.0
    %748 = vmatprep.subr.mxu0 0.0
    %749 = vmatpush2.msra.mxu0 0.0
    %750 = vmatprep.subr.mxu0 0.0
    %751 = vmatpush2.msra.mxu0 0.0
    %752 = vmatprep.subr.mxu0 0.0
    %753 = vmatpush2.msra.mxu0 0.0
    %754 = vmatprep.subr.mxu0 0.0
    %755 = vmatpush2.msra.mxu0 0.0
    %756 = vmatprep.subr.mxu0 0.0
    %757 = vmatpush2.msra.mxu0 0.0
    %758 = vmatprep.subr.mxu0 0.0
    %759 = vmatpush2.msra.mxu0 0.0
    %760 = vmatprep.subr.mxu0 0.0
    %761 = vmatpush2.msra.mxu0 0.0
    %762 = vmatprep.subr.mxu0 0.0
    %763 = vmatpush2.msra.mxu0 0.0
    %764 = vmatprep.subr.mxu0 0.0
    %765 = vmatpush2.msra.mxu0 0.0
    %766 = vmatprep.mubr.f32.mxu0 0.0
    %767 = vmatmul.mubr.f32.gmra.mxu0 %v700
    %v768 = vpop.f32.mrf.mxu0
    %v769 = vadd.f32 %v656, %v768
    %v770 = vpop.f32.mrf.mxu0
    %771 = vdwg.mxu0
    %v772 = vld [vmem:[%s0] sm:$0xff]
    %v773 = vsel %vm160, %v772, 0.0
    %v774 = vrot.slane %v773, 4
    %v775 = vadd.f32 %v773, %v774
    %v776 = vrot.slane %v775, 2
    %v777 = vadd.f32 %v775, %v776
    %v778 = vrot.slane %v777, 1
    %v779 = vadd.f32 %v777, %v778
    %v780 = vrcp.pop 8.0
    %v781 = vmul.f32 %v779, %v780
    %v782 = vmul.f32 %v769, %v781
    %v783 = vsel %vm160, %v782, 0.0
    %784 = vadd.xlane.f32.xlu0 %v783
    %v785 = vpop.xlane.xlu0 %784
    %v786 = vmul.f32 %v785, %v769
    %v787 = vsel %vm160, %v786, 0.0
    %v788 = vrot.slane %v787, 4
    %v789 = vadd.f32 %v787, %v788
    %v790 = vrot.slane %v789, 2
    %v791 = vadd.f32 %v789, %v790
    %v792 = vrot.slane %v791, 1
    %v793 = vadd.f32 %v791, %v792
    %v794 = vlaneseq
    %v795 = vshrl.u32 %v794, 7
    %v796 = vsub.s32 3, %v795
    %v797 = vrot.slane %v57, %v796
    %v798 = vmul.f32 %v772, %v797
    %v799 = vsel %vm160, %v798, 0.0
    %800 = vadd.xlane.f32.xlu0 %v799
    %v801 = vpop.xlane.xlu0 %800
    %v802 = vmul.f32 %v793, %v57
    %vm803 = vcmask 258052
    %v804 = vsel %vm803, %v802, 0.0
    %805 = vadd.xlane.f32.xlu0 %v804
    %v806 = vpop.xlane.xlu0 %805
    %v807 = vlaneseq
    %v808 = vshrl.u32 %v807, 7
    %v809 = vsub.s32 4, %v808
    %v810 = vrot.slane %v806, %v809
    %v811 = vadd.f32 %v801, %v810
    %v812 = vlaneseq
    %v813 = vshrl.u32 %v812, 7
    %v814 = vsub.s32 2, %v813
    %v815 = vrot.slane %v57, %v814
    %v816 = vadd.f32 %v811, %v815
    %v817 = vtanh.pop %v816
    %819 = vset.pattern.permute.xlu0 0
    %820 = vperm.xlu0 %819, %v817
    %v821 = vpop.permute.xlu0 %820
    %v823 = vmul.f32 %v821, %v772
    %824 = vst.msk [vmem:[#allocation5] sm:$0xff] %vm160, %v823
    %825 = vxpose.xlu0.b32.start [1/16] %v542, 128
    %826 = vxpose.xlu0.b32.cont [2/16] %v544, 128
    %827 = vxpose.xlu0.b32.cont [3/16] 0.0, 128
    %828 = vxpose.xlu0.b32.cont [4/16] 0.0, 128
    %829 = vxpose.xlu0.b32.cont [5/16] 0.0, 128
    %830 = vxpose.xlu0.b32.cont [6/16] 0.0, 128
    %831 = vxpose.xlu0.b32.cont [7/16] 0.0, 128
    %832 = vxpose.xlu0.b32.cont [8/16] 0.0, 128
    %833 = vxpose.xlu0.b32.cont [9/16] 0.0, 128
    %834 = vxpose.xlu0.b32.cont [10/16] 0.0, 128
    %835 = vxpose.xlu0.b32.cont [11/16] 0.0, 128
    %836 = vxpose.xlu0.b32.cont [12/16] 0.0, 128
    %837 = vxpose.xlu0.b32.cont [13/16] 0.0, 128
    %838 = vxpose.xlu0.b32.cont [14/16] 0.0, 128
    %839 = vxpose.xlu0.b32.cont [15/16] 0.0, 128
    %840 = vxpose.xlu0.b32.end [16/16] 0.0, 128
    %v841 = vpop.trf.xlu0
    %v842 = vpop.trf.xlu0
    %v843 = vpop.trf.xlu0
    %v844 = vpop.trf.xlu0
    %v845 = vpop.trf.xlu0
    %v846 = vpop.trf.xlu0
    %v847 = vpop.trf.xlu0
    %v848 = vpop.trf.xlu0
    %v849 = vpop.trf.xlu0
    %v850 = vpop.trf.xlu0
    %v851 = vpop.trf.xlu0
    %v852 = vpop.trf.xlu0
    %v853 = vpop.trf.xlu0
    %v854 = vpop.trf.xlu0
    %v855 = vpop.trf.xlu0
    %v856 = vpop.trf.xlu0
    %859 = vrot.lane.b32.xlu0 %v448, 120
    %v860 = vpop.permute.xlu0 %859
    %861 = vrot.lane.b32.xlu0 %v453, 120
    %v862 = vpop.permute.xlu0 %861
    %v866 = vsel %vm585, %v841, 0
    %868 = vmatprep.subr.mxu0 0.0
    %869 = vmatpush1.msra.mxu0 0.0
    %870 = vmatprep.subr.mxu0 0.0
    %871 = vmatpush1.msra.mxu0 0.0
    %872 = vmatprep.subr.mxu0 0.0
    %873 = vmatpush1.msra.mxu0 0.0
    %874 = vmatprep.subr.mxu0 0.0
    %875 = vmatpush1.msra.mxu0 0.0
    %876 = vmatprep.subr.mxu0 0.0
    %877 = vmatpush1.msra.mxu0 0.0
    %878 = vmatprep.subr.mxu0 0.0
    %879 = vmatpush1.msra.mxu0 0.0
    %880 = vmatprep.subr.mxu0 0.0
    %881 = vmatpush1.msra.mxu0 0.0
    %882 = vmatprep.subr.mxu0 0.0
    %883 = vmatpush1.msra.mxu0 0.0
    %884 = vmatprep.subr.mxu0 0.0
    %885 = vmatpush1.msra.mxu0 0.0
    %886 = vmatprep.subr.mxu0 0.0
    %887 = vmatpush1.msra.mxu0 0.0
    %888 = vmatprep.subr.mxu0 0.0
    %889 = vmatpush1.msra.mxu0 0.0
    %890 = vmatprep.subr.mxu0 0.0
    %891 = vmatpush1.msra.mxu0 0.0
    %892 = vmatprep.subr.mxu0 0.0
    %893 = vmatpush1.msra.mxu0 0.0
    %894 = vmatprep.subr.mxu0 0.0
    %895 = vmatpush1.msra.mxu0 0.0
    %896 = vmatprep.subr.mxu0 0.0
    %897 = vmatpush1.msra.mxu0 %v862
    %898 = vmatprep.subr.mxu0 0.0
    %899 = vmatpush1.msra.mxu0 %v860
    %900 = vmatprep.subr.mxu0 0.0
    %901 = vmatpush2.msra.mxu0 0.0
    %902 = vmatprep.subr.mxu0 0.0
    %903 = vmatpush2.msra.mxu0 0.0
    %904 = vmatprep.subr.mxu0 0.0
    %905 = vmatpush2.msra.mxu0 0.0
    %906 = vmatprep.subr.mxu0 0.0
    %907 = vmatpush2.msra.mxu0 0.0
    %908 = vmatprep.subr.mxu0 0.0
    %909 = vmatpush2.msra.mxu0 0.0
    %910 = vmatprep.subr.mxu0 0.0
    %911 = vmatpush2.msra.mxu0 0.0
    %912 = vmatprep.subr.mxu0 0.0
    %913 = vmatpush2.msra.mxu0 0.0
    %914 = vmatprep.subr.mxu0 0.0
    %915 = vmatpush2.msra.mxu0 0.0
    %916 = vmatprep.subr.mxu0 0.0
    %917 = vmatpush2.msra.mxu0 0.0
    %918 = vmatprep.subr.mxu0 0.0
    %919 = vmatpush2.msra.mxu0 0.0
    %920 = vmatprep.subr.mxu0 0.0
    %921 = vmatpush2.msra.mxu0 0.0
    %922 = vmatprep.subr.mxu0 0.0
    %923 = vmatpush2.msra.mxu0 0.0
    %924 = vmatprep.subr.mxu0 0.0
    %925 = vmatpush2.msra.mxu0 0.0
    %926 = vmatprep.subr.mxu0 0.0
    %927 = vmatpush2.msra.mxu0 0.0
    %928 = vmatprep.subr.mxu0 0.0
    %929 = vmatpush2.msra.mxu0 0.0
    %930 = vmatprep.subr.mxu0 0.0
    %931 = vmatpush2.msra.mxu0 0.0
    %932 = vmatprep.mubr.f32.mxu0 0.0
    %933 = vmatmul.mubr.f32.gmra.mxu0 %v866
    %v934 = vpop.f32.mrf.mxu0
    %v935 = vadd.f32 0.0, %v934
    %v936 = vpop.f32.mrf.mxu0
    %937 = vdwg.mxu0
    %938 = vxpose.xlu0.b32.start [1/16] %v498, 128
    %939 = vxpose.xlu0.b32.cont [2/16] %v500, 128
    %940 = vxpose.xlu0.b32.cont [3/16] 0.0, 128
    %941 = vxpose.xlu0.b32.cont [4/16] 0.0, 128
    %942 = vxpose.xlu0.b32.cont [5/16] 0.0, 128
    %943 = vxpose.xlu0.b32.cont [6/16] 0.0, 128
    %944 = vxpose.xlu0.b32.cont [7/16] 0.0, 128
    %945 = vxpose.xlu0.b32.cont [8/16] 0.0, 128
    %946 = vxpose.xlu0.b32.cont [9/16] 0.0, 128
    %947 = vxpose.xlu0.b32.cont [10/16] 0.0, 128
    %948 = vxpose.xlu0.b32.cont [11/16] 0.0, 128
    %949 = vxpose.xlu0.b32.cont [12/16] 0.0, 128
    %950 = vxpose.xlu0.b32.cont [13/16] 0.0, 128
    %951 = vxpose.xlu0.b32.cont [14/16] 0.0, 128
    %952 = vxpose.xlu0.b32.cont [15/16] 0.0, 128
    %953 = vxpose.xlu0.b32.end [16/16] 0.0, 128
    %v954 = vpop.trf.xlu0
    %v955 = vpop.trf.xlu0
    %v956 = vpop.trf.xlu0
    %v957 = vpop.trf.xlu0
    %v958 = vpop.trf.xlu0
    %v959 = vpop.trf.xlu0
    %v960 = vpop.trf.xlu0
    %v961 = vpop.trf.xlu0
    %v962 = vpop.trf.xlu0
    %v963 = vpop.trf.xlu0
    %v964 = vpop.trf.xlu0
    %v965 = vpop.trf.xlu0
    %v966 = vpop.trf.xlu0
    %v967 = vpop.trf.xlu0
    %v968 = vpop.trf.xlu0
    %v969 = vpop.trf.xlu0
    %972 = vrot.lane.b32.xlu0 %v351, 120
    %v973 = vpop.permute.xlu0 %972
    %974 = vrot.lane.b32.xlu0 %v356, 120
    %v975 = vpop.permute.xlu0 %974
    %v979 = vsel %vm585, %v954, 0
    %981 = vmatprep.subr.mxu0 0.0
    %982 = vmatpush1.msra.mxu0 0.0
    %983 = vmatprep.subr.mxu0 0.0
    %984 = vmatpush1.msra.mxu0 0.0
    %985 = vmatprep.subr.mxu0 0.0
    %986 = vmatpush1.msra.mxu0 0.0
    %987 = vmatprep.subr.mxu0 0.0
    %988 = vmatpush1.msra.mxu0 0.0
    %989 = vmatprep.subr.mxu0 0.0
    %990 = vmatpush1.msra.mxu0 0.0
    %991 = vmatprep.subr.mxu0 0.0
    %992 = vmatpush1.msra.mxu0 0.0
    %993 = vmatprep.subr.mxu0 0.0
    %994 = vmatpush1.msra.mxu0 0.0
    %995 = vmatprep.subr.mxu0 0.0
    %996 = vmatpush1.msra.mxu0 0.0
    %997 = vmatprep.subr.mxu0 0.0
    %998 = vmatpush1.msra.mxu0 0.0
    %999 = vmatprep.subr.mxu0 0.0
    %1000 = vmatpush1.msra.mxu0 0.0
    %1001 = vmatprep.subr.mxu0 0.0
    %1002 = vmatpush1.msra.mxu0 0.0
    %1003 = vmatprep.subr.mxu0 0.0
    %1004 = vmatpush1.msra.mxu0 0.0
    %1005 = vmatprep.subr.mxu0 0.0
    %1006 = vmatpush1.msra.mxu0 0.0
    %1007 = vmatprep.subr.mxu0 0.0
    %1008 = vmatpush1.msra.mxu0 0.0
    %1009 = vmatprep.subr.mxu0 0.0
    %1010 = vmatpush1.msra.mxu0 %v975
    %1011 = vmatprep.subr.mxu0 0.0
    %1012 = vmatpush1.msra.mxu0 %v973
    %1013 = vmatprep.subr.mxu0 0.0
    %1014 = vmatpush2.msra.mxu0 0.0
    %1015 = vmatprep.subr.mxu0 0.0
    %1016 = vmatpush2.msra.mxu0 0.0
    %1017 = vmatprep.subr.mxu0 0.0
    %1018 = vmatpush2.msra.mxu0 0.0
    %1019 = vmatprep.subr.mxu0 0.0
    %1020 = vmatpush2.msra.mxu0 0.0
    %1021 = vmatprep.subr.mxu0 0.0
    %1022 = vmatpush2.msra.mxu0 0.0
    %1023 = vmatprep.subr.mxu0 0.0
    %1024 = vmatpush2.msra.mxu0 0.0
    %1025 = vmatprep.subr.mxu0 0.0
    %1026 = vmatpush2.msra.mxu0 0.0
    %1027 = vmatprep.subr.mxu0 0.0
    %1028 = vmatpush2.msra.mxu0 0.0
    %1029 = vmatprep.subr.mxu0 0.0
    %1030 = vmatpush2.msra.mxu0 0.0
    %1031 = vmatprep.subr.mxu0 0.0
    %1032 = vmatpush2.msra.mxu0 0.0
    %1033 = vmatprep.subr.mxu0 0.0
    %1034 = vmatpush2.msra.mxu0 0.0
    %1035 = vmatprep.subr.mxu0 0.0
    %1036 = vmatpush2.msra.mxu0 0.0
    %1037 = vmatprep.subr.mxu0 0.0
    %1038 = vmatpush2.msra.mxu0 0.0
    %1039 = vmatprep.subr.mxu0 0.0
    %1040 = vmatpush2.msra.mxu0 0.0
    %1041 = vmatprep.subr.mxu0 0.0
    %1042 = vmatpush2.msra.mxu0 0.0
    %1043 = vmatprep.subr.mxu0 0.0
    %1044 = vmatpush2.msra.mxu0 0.0
    %1045 = vmatprep.mubr.f32.mxu0 0.0
    %1046 = vmatmul.mubr.f32.gmra.mxu0 %v979
    %v1047 = vpop.f32.mrf.mxu0
    %v1048 = vadd.f32 %v935, %v1047
    %v1049 = vpop.f32.mrf.mxu0
    %1050 = vdwg.mxu0
    %s1051 = scalar_lea.vmem %s0, 8
    %v1052 = vld [vmem:[%s1051] sm:$0xff]
    %v1053 = vsel %vm160, %v1052, 0.0
    %v1054 = vrot.slane %v1053, 4
    %v1055 = vadd.f32 %v1053, %v1054
    %v1056 = vrot.slane %v1055, 2
    %v1057 = vadd.f32 %v1055, %v1056
    %v1058 = vrot.slane %v1057, 1
    %v1059 = vadd.f32 %v1057, %v1058
    %v1060 = vmul.f32 %v1059, %v780
    %v1061 = vmul.f32 %v1048, %v1060
    %v1062 = vsel %vm160, %v1061, 0.0
    %1063 = vadd.xlane.f32.xlu0 %v1062
    %v1064 = vpop.xlane.xlu0 %1063
    %v1065 = vmul.f32 %v1064, %v1048
    %v1066 = vsel %vm160, %v1065, 0.0
    %v1067 = vrot.slane %v1066, 4
    %v1068 = vadd.f32 %v1066, %v1067
    %v1069 = vrot.slane %v1068, 2
    %v1070 = vadd.f32 %v1068, %v1069
    %v1071 = vrot.slane %v1070, 1
    %v1072 = vadd.f32 %v1070, %v1071
    %v1073 = vmul.f32 %v1052, %v797
    %v1074 = vsel %vm160, %v1073, 0.0
    %1075 = vadd.xlane.f32.xlu0 %v1074
    %v1076 = vpop.xlane.xlu0 %1075
    %v1077 = vmul.f32 %v1072, %v57
    %v1078 = vsel %vm803, %v1077, 0.0
    %1079 = vadd.xlane.f32.xlu0 %v1078
    %v1080 = vpop.xlane.xlu0 %1079
    %v1081 = vlaneseq
    %v1082 = vshrl.u32 %v1081, 7
    %v1083 = vsub.s32 4, %v1082
    %v1084 = vrot.slane %v1080, %v1083
    %v1085 = vadd.f32 %v1076, %v1084
    %v1086 = vadd.f32 %v1085, %v815
    %v1087 = vtanh.pop %v1086
    %1089 = vset.pattern.permute.xlu0 0
    %1090 = vperm.xlu0 %1089, %v1087
    %v1091 = vpop.permute.xlu0 %1090
    %v1093 = vmul.f32 %v1091, %v1052
    %s1094 = scalar_lea.vmem [#allocation5], 8
    %1095 = vst.msk [vmem:[%s1094] sm:$0xff] %vm160, %v1093
    // Predicated region
    $region26: #{tpu_custom_call.1} parent=1 // pred_check
      _
    $region27: #{tpu_custom_call.1} parent=1 // pred_check_branch
      %1097 = sbr.rel (0) target = $region29
    $region28: #{tpu_custom_call.1} parent=1 // pred_region
      %s1099 = ssub.s32 256, 256
      %1100 = vsyncadd [#allocation4], %s1099
      %s1101 = sshll.u32 [#allocation5], 4
      %s1102 = int_to_ptr.vmem [resolvable:$true] %s1101
      %1107 = dma.vmem_to_hbm [thread:$0]  %s1102, 256, %s5, [#allocation4], 128, 128, 8
    $region29: #{tpu_custom_call.1} parent=1 // pred_fallthru
      _
    // Predicated region
    $region30: #{tpu_custom_call.1} parent=1 // pred_check
      _
    $region31: #{tpu_custom_call.1} parent=1 // pred_check_branch
      %1109 = sbr.rel (0) target = $region33
    $region32: #{tpu_custom_call.1} parent=1 // pred_region
      %1110 = dma.done [#allocation4], 256
    $region33: #{tpu_custom_call.1} parent=1 // pred_fallthru
      _
    %1111 = vsyncpa [#allocation3], 1
    %1112 = vsyncpa [#allocation4], 1

</llo_original>
